<compile_context>
chip_gen: v5e
topology: v5e:2x2
jax: 0.10.0
libtpu: 0.0.40
codegen_flags: <defaults>
</compile_context>

<pallas_src>
import math

import jax
import jax.numpy as jnp
from jax.experimental import pallas as pl
from jax.experimental.pallas import tpu as pltpu


def _round_up(x, m):
    return ((x + m - 1) // m) * m


def _masked_linear_kernel(x_ref, wt_ref, b_ref, o_ref, acc_ref):
    """Computes one (tm, tn) output tile; K (in_dim) streamed over grid axis 2."""
    k = pl.program_id(2)

    @pl.when(k == 0)
    def _():
        acc_ref[...] = jnp.zeros_like(acc_ref)

    # bf16 x bf16 -> f32 accumulate on the MXU. Wt is pre-transposed
    # (in_dim, out_dim), so no in-kernel transpose / relayout is needed.
    acc_ref[...] += jnp.dot(
        x_ref[...], wt_ref[...], preferred_element_type=jnp.float32
    )

    @pl.when(k == pl.num_programs(2) - 1)
    def _():
        # Bias add + cast exactly once, on the finished f32 accumulator.
        o_ref[...] = (acc_ref[...] + b_ref[...]).astype(o_ref.dtype)


def mask_flat_linear(x, W, b, maskmat=None, dim_a_mask=None,
                     *, compute_dtype=jnp.bfloat16,
                     tm=256, tn=256, tk=512):
    """x: (..., in_dim) -> (..., out_dim). W: (out_dim, in_dim), b: (out_dim,)."""
    *lead, in_dim = x.shape
    out_dim = W.shape[0]
    B = int(math.prod(lead)) if lead else 1

    # Fold the constant kron mask into the weight once (non-trainable, so this
    # is pure preprocessing) — avoids streaming the expanded mask from HBM.
    if maskmat is not None:
        if dim_a_mask is None:
            dim_m = maskmat.shape[0]
            dim_a_mask = jnp.ones((out_dim // dim_m, in_dim // dim_m), W.dtype)
        W = W * jnp.kron(maskmat, dim_a_mask)

    # Pre-transpose so the kernel contracts x @ Wt with no XLU transpose.
    Wt = W.T                                             # (in_dim, out_dim)

    # Tile sizes: lane dims multiples of 128, sublane dims multiples of 16
    # (bf16 packing). Small problems shrink tiles to the padded extents.
    tm = min(tm, _round_up(B, 16))
    tn = min(tn, _round_up(out_dim, 128))
    tk = min(tk, _round_up(in_dim, 128))

    Bp = _round_up(B, tm)
    Np = _round_up(out_dim, tn)
    Kp = _round_up(in_dim, tk)

    # Zero-pad to tile multiples (zeros contribute nothing to the matmul;
    # padded output columns/rows are sliced off below).
    x2 = jnp.zeros((Bp, Kp), compute_dtype).at[:B, :in_dim].set(
        x.reshape(B, in_dim).astype(compute_dtype))
    Wt_p = jnp.zeros((Kp, Np), compute_dtype).at[:in_dim, :out_dim].set(
        Wt.astype(compute_dtype))
    b2 = jnp.zeros((1, Np), jnp.float32).at[:, :out_dim].set(
        b.reshape(1, out_dim).astype(jnp.float32))

    grid = (Bp // tm, Np // tn, Kp // tk)   # K (reduction) axis last

    out = pl.pallas_call(
        _masked_linear_kernel,
        out_shape=jax.ShapeDtypeStruct((Bp, Np), x.dtype),
        grid_spec=pltpu.PrefetchScalarGridSpec(
            num_scalar_prefetch=0,
            grid=grid,
            in_specs=[
                pl.BlockSpec((tm, tk), lambda i, j, k: (i, k)),   # x tile
                pl.BlockSpec((tk, tn), lambda i, j, k: (k, j)),   # masked Wt tile
                pl.BlockSpec((1, tn), lambda i, j, k: (0, j)),    # bias tile
            ],
            out_specs=pl.BlockSpec((tm, tn), lambda i, j, k: (i, j)),
            scratch_shapes=[pltpu.VMEM((tm, tn), jnp.float32)],
        ),
        compiler_params=pltpu.CompilerParams(
            dimension_semantics=("parallel", "parallel", "arbitrary"),
            vmem_limit_bytes=32 * 1024 * 1024,
        ),
    )(x2, Wt_p, b2)

    return out[:B, :out_dim].reshape(*lead, out_dim)


if __name__ == "__main__":
    # Small shapes consistent with the module's constraints, chosen so the
    # grid has >1 step along both the out_dim and K axes (tn=tk=128 below).
    dim_m, in_dim, out_dim = 4, 256, 256
    batch, seq = 2, 8

    key = jax.random.PRNGKey(0)
    kx, kw, kb = jax.random.split(key, 3)

    initializer_range = 0.1
    x = jax.random.normal(kx, (batch, seq, in_dim), jnp.float32)
    W = initializer_range * jax.random.normal(kw, (out_dim, in_dim), jnp.float32)
    b = initializer_range * jax.random.normal(kb, (out_dim,), jnp.float32)

    # dim_a_mask is all-ones (non-trainable), maskmat is a block mask.
    dim_a_mask = jnp.ones((out_dim // dim_m, in_dim // dim_m), jnp.float32)
    maskmat = jnp.tril(jnp.ones((dim_m, dim_m), jnp.float32))

    y = mask_flat_linear(x, W, b, maskmat, dim_a_mask, tn=128, tk=128)
    y = jax.block_until_ready(y)
    assert y.shape == (batch, seq, out_dim)

    # Reference check. The kernel matmuls in bf16 with f32 accumulation, so the
    # tight check uses bf16-rounded inputs (products are then exact in f32).
    kronmask = jnp.kron(maskmat, dim_a_mask)
    Wm = W * kronmask
    Wm_bf = Wm.astype(jnp.bfloat16).astype(jnp.float32)
    x_bf = x.astype(jnp.bfloat16).astype(jnp.float32)
    y_ref_bf = jnp.einsum('oi,...i->...o', Wm_bf, x_bf,
                          precision=jax.lax.Precision.HIGHEST) + b
    assert jnp.allclose(y, y_ref_bf, atol=1e-4, rtol=1e-4)

    # Loose sanity check against the full-f32 semantics of the module.
    y_ref_f32 = jnp.einsum('oi,...i->...o', Wm, x,
                           precision=jax.lax.Precision.HIGHEST) + b
    assert jnp.allclose(y, y_ref_f32, atol=1e-1, rtol=5e-2)

    print("KERNEL_OK")
</pallas_src>

<mosaic_0001>
module attributes {stable_mosaic.version = 11 : i64} {
  func.func @_masked_linear_kernel(%arg0: i32, %arg1: i32, %arg2: i32, %arg3: memref<16x128xbf16, #tpu.memory_space<vmem>>, %arg4: memref<128x128xbf16, #tpu.memory_space<vmem>>, %arg5: memref<1x128xf32, #tpu.memory_space<vmem>>, %arg6: memref<16x128xf32, #tpu.memory_space<vmem>>, %arg7: memref<16x128xf32, #tpu.memory_space<vmem>>) attributes {dimension_semantics = [#tpu.dimension_semantics<parallel>, #tpu.dimension_semantics<parallel>, #tpu.dimension_semantics<arbitrary>], iteration_bounds = array<i64: 1, 2, 2>, scalar_prefetch = 0 : i64, scratch_operands = 1 : i64, tpu.core_type = #tpu.core_type<tc>, window_params = [{transform_indices = @transform_0, window_bounds = array<i64: 16, 128>}, {transform_indices = @transform_1, window_bounds = array<i64: 128, 128>}, {transform_indices = @transform_2, window_bounds = array<i64: 1, 128>}, {transform_indices = @transform_3, window_bounds = array<i64: 16, 128>}]} {
    %c0_i32 = arith.constant 0 : i32
    %0 = arith.cmpi eq, %arg2, %c0_i32 : i32
    %1 = arith.extui %0 : i1 to i32
    %c0_i32_0 = arith.constant 0 : i32
    %2 = arith.cmpi ne, %1, %c0_i32_0 : i32
    scf.if %2 {
      %cst_9 = arith.constant 0.000000e+00 : f32
      %12 = vector.broadcast %cst_9 : f32 to vector<16x128xf32>
      %c0_10 = arith.constant 0 : index
      %c0_11 = arith.constant 0 : index
      %13 = vector.load %arg7[%c0_10, %c0_11] : memref<16x128xf32, #tpu.memory_space<vmem>>, vector<16x128xf32>
      tpu.vector_store %arg7[%c0_10, %c0_11], %12 {strides = array<i32>} : memref<16x128xf32, #tpu.memory_space<vmem>>, vector<16x128xf32>,
    } else {
    }
    %c0 = arith.constant 0 : index
    %c0_1 = arith.constant 0 : index
    %3 = vector.load %arg7[%c0, %c0_1] : memref<16x128xf32, #tpu.memory_space<vmem>>, vector<16x128xf32>
    %c0_2 = arith.constant 0 : index
    %c0_3 = arith.constant 0 : index
    %4 = vector.load %arg3[%c0_2, %c0_3] : memref<16x128xbf16, #tpu.memory_space<vmem>>, vector<16x128xbf16>
    %c0_4 = arith.constant 0 : index
    %c0_5 = arith.constant 0 : index
    %5 = vector.load %arg4[%c0_4, %c0_5] : memref<128x128xbf16, #tpu.memory_space<vmem>>, vector<128x128xbf16>
    %cst = arith.constant dense<0.000000e+00> : vector<16x128xf32>
    %6 = tpu.matmul %4, %5, %cst {dimension_numbers = #tpu.dot_dimension_numbers<[1], [0], [0], [1], [0, 0, 1, 1], [], []>} : vector<16x128xbf16>, vector<128x128xbf16>, vector<16x128xf32> -> vector<16x128xf32>
    %7 = arith.addf %3, %6 : vector<16x128xf32>
    %c0_6 = arith.constant 0 : index
    %c0_7 = arith.constant 0 : index
    %8 = vector.load %arg7[%c0_6, %c0_7] : memref<16x128xf32, #tpu.memory_space<vmem>>, vector<16x128xf32>
    tpu.vector_store %arg7[%c0_6, %c0_7], %7 {strides = array<i32>} : memref<16x128xf32, #tpu.memory_space<vmem>>, vector<16x128xf32>,
    %c1_i32 = arith.constant 1 : i32
    %9 = arith.cmpi eq, %arg2, %c1_i32 : i32
    %10 = arith.extui %9 : i1 to i32
    %c0_i32_8 = arith.constant 0 : i32
    %11 = arith.cmpi ne, %10, %c0_i32_8 : i32
    scf.if %11 {
      %c0_9 = arith.constant 0 : index
      %c0_10 = arith.constant 0 : index
      %12 = vector.load %arg7[%c0_9, %c0_10] : memref<16x128xf32, #tpu.memory_space<vmem>>, vector<16x128xf32>
      %c0_11 = arith.constant 0 : index
      %c0_12 = arith.constant 0 : index
      %13 = vector.load %arg5[%c0_11, %c0_12] : memref<1x128xf32, #tpu.memory_space<vmem>>, vector<1x128xf32>
      %14 = vector.broadcast %13 : vector<1x128xf32> to vector<16x128xf32>
      %15 = arith.addf %12, %14 : vector<16x128xf32>
      %c0_13 = arith.constant 0 : index
      %c0_14 = arith.constant 0 : index
      %16 = vector.load %arg6[%c0_13, %c0_14] : memref<16x128xf32, #tpu.memory_space<vmem>>, vector<16x128xf32>
      tpu.vector_store %arg6[%c0_13, %c0_14], %15 {strides = array<i32>} : memref<16x128xf32, #tpu.memory_space<vmem>>, vector<16x128xf32>,
    } else {
    }
    return
  }
  func.func @transform_0(%arg0: i32, %arg1: i32, %arg2: i32) -> (i32, i32) {
    %c0_i32 = arith.constant 0 : i32
    return %arg0, %arg2 : i32, i32
  }
  func.func @transform_1(%arg0: i32, %arg1: i32, %arg2: i32) -> (i32, i32) {
    %c0_i32 = arith.constant 0 : i32
    return %arg2, %arg1 : i32, i32
  }
  func.func @transform_2(%arg0: i32, %arg1: i32, %arg2: i32) -> (i32, i32) {
    %c0_i32 = arith.constant 0 : i32
    %c0_i32_0 = arith.constant 0 : i32
    return %c0_i32, %arg1 : i32, i32
  }
  func.func @transform_3(%arg0: i32, %arg1: i32, %arg2: i32) -> (i32, i32) {
    %c0_i32 = arith.constant 0 : i32
    return %arg0, %arg1 : i32, i32
  }
}

</mosaic_0001>

<llo_original>
// kernel: tpu_custom_call.1
$region0: #{tpu_custom_call.1}
  #allocation0 [shape = 'u32[]', space=smem, size = 0x4, offset = 0x4, fixed_abs, tag = 'smem constant byte address 0x4 - core index']
  #allocation1 [shape = 'u32[72,128]{1,0:T(1,128)}', space=vmem, size = 0x9000, scoped, tag = 'internal scratch']
  #allocation2 [shape = 'f32[16,128]{1,0:T(8,128)}', space=vmem, size = 0x2000, scoped, tag = 'scratch operand']
  %s0 = inlined_call_operand.hbm [shape: bf16[16,256], index: 0, kind: input, shape index: {}]
  %s1 = inlined_call_operand.hbm [shape: bf16[256,256], index: 1, kind: input, shape index: {}]
  %s2 = inlined_call_operand.hbm [shape: f32[1,256], index: 2, kind: input, shape index: {}]
  %s3 = inlined_call_operand.hbm [shape: f32[16,256], index: 3, kind: output, shape index: {}]
  %s4 = sld [smem:[#allocation0]]
  $region65: #{tpu_custom_call.1} parent=0
    _
  %s6 = ssub.s32 1, %s4
  %s7 = scalar_select 0, %s6, %s4
  $region1: #{tpu_custom_call.1} parent=0
    #allocation3 [shape = 'u8[8192]{0}', space=vmem, size = 0x2000, scoped, tag = 'input window, operand 0']
    #allocation4 [shape = 's32[2]{0}', space=sflag, size = 0x8, scoped, tag = 'scoped memory for tpu_custom_call.1']
    #allocation5 [shape = 's32[2]{0}', space=sflag, size = 0x8, scoped, tag = 'scoped memory for tpu_custom_call.1']
    #allocation6 [shape = 'u8[65536]{0}', space=vmem, size = 0x10000, scoped, tag = 'input window, operand 1']
    #allocation7 [shape = 's32[2]{0}', space=sflag, size = 0x8, scoped, tag = 'scoped memory for tpu_custom_call.1']
    #allocation8 [shape = 'u8[1024]{0}', space=vmem, size = 0x400, scoped, tag = 'input window, operand 2']
    #allocation9 [shape = 'u8[16384]{0}', space=vmem, size = 0x4000, scoped, tag = 'output window, operand 0']
    %8 = vsyncpa [#allocation4], 0
    %s9 = scalar_lea.sflag [#allocation4], 1
    %10 = vsyncpa %s9, 0
    %11 = vsyncpa [#allocation7], 0
    %s12 = scalar_lea.sflag [#allocation7], 1
    %13 = vsyncpa %s12, 0
    %14 = vsyncpa [#allocation5], 0
    %s15 = scalar_lea.sflag [#allocation5], 1
    %16 = vsyncpa %s15, 0
    loop: start=0, step=1, limit=6
    $region2: #{tpu_custom_call.1} parent=1 // loop_pre_header
      _
    $region3: #{tpu_custom_call.1} parent=1 // loop_header
      %s18 = sphi 0, %s22
      %p19 = scmp.ge.s32.totalorder %s18, 6
      %s25 = sphi 0, %s44
      %s26 = sphi 0, %s40
      %s27 = sphi 0, %s36
      %s28 = sphi 0, %s25
      %s29 = sphi 0, %s26
      %s30 = sphi 0, %s27
      %s31 = sphi 0, %s28
      %s32 = sphi 0, %s29
      %s33 = sphi 0, %s30
      %s49 = sphi 0, %s51
      %s52 = sphi 0, %s49
      %s53 = sphi 0, %s52
      %s69 = sphi 0, %s53
      %s77 = sphi 0, %s79
      %s80 = sphi 0, %s77
      %s81 = sphi 0, %s80
      %s97 = sphi 0, %s81
      %s103 = sphi 0, %s105
      %s106 = sphi 0, %s103
      %s107 = sphi 0, %s106
      %s123 = sphi 0, %s107
      %s131 = sphi 0, %s133
      %s134 = sphi 0, %s131
      %s135 = sphi 0, %s134
      %s151 = sphi 0, %s135
    $region4: #{tpu_custom_call.1} parent=1 // loop_header_branch
      %21 = sbr.rel (%p19) target = $region8
    $region5: #{tpu_custom_call.1} parent=1 // loop_body
      %s23 = ssub.s32 %s18, 1
      %s24 = ssub.s32 %s18, 2
      %s34 = sadd.s32 1, %s27
      %p35 = scmp.ge.s32.totalorder %s34, 2
      %s36 = scalar_select %p35, 0, %s34
      %s37 = sadd.s32 1, %s26
      %s38 = scalar_select %p35, %s37, %s26
      %p39 = scmp.ge.s32.totalorder %s38, 2
      %s40 = scalar_select %p39, 0, %s38
      %s41 = sadd.s32 1, %s25
      %s42 = scalar_select %p39, %s41, %s25
      %p43 = scmp.ge.s32.totalorder %s42, 1
      %s44 = scalar_select %p43, 0, %s42
      %s45 = ssub.s32 %s25, %s44
      %s46 = ssub.s32 %s27, %s36
      %s47 = sor.u32 %s45, %s46
      %p48 = scmp.eq.s32.totalorder %s47, 0
      %s50 = sadd.s32 %s49, 1
      %s51 = scalar_select %p48, %s49, %s50
      %p54 = pneg %p48
      %p55 = scmp.eq.s32.totalorder %s18, 3
      %p56 = por %p54, %p55
      %p57 = scmp.ne.s32.totalorder %s49, %s52
      %p58 = scmp.eq.s32.totalorder %s18, 0
      %p59 = por %p57, %p58
      %p60 = scmp.ne.s32.totalorder %s49, %s52
      %p61 = scmp.eq.s32.totalorder %s23, 3
      %p62 = por %p60, %p61
      %p63 = scmp.ne.s32.totalorder %s52, %s53
      %p64 = scmp.eq.s32.totalorder %s23, 0
      %p65 = por %p63, %p64
      %p66 = scmp.ne.s32.totalorder %s52, %s53
      %p67 = scmp.eq.s32.totalorder %s24, 3
      %p68 = por %p66, %p67
      %p70 = scmp.ne.s32.totalorder %s53, %s69
      %p71 = scmp.eq.s32.totalorder %s24, 0
      %p72 = por %p70, %p71
      %s73 = ssub.s32 %s27, %s36
      %s74 = ssub.s32 %s26, %s40
      %s75 = sor.u32 %s73, %s74
      %p76 = scmp.eq.s32.totalorder %s75, 0
      %s78 = sadd.s32 %s77, 1
      %s79 = scalar_select %p76, %s77, %s78
      %p82 = pneg %p76
      %p83 = scmp.eq.s32.totalorder %s18, 3
      %p84 = por %p82, %p83
      %p85 = scmp.ne.s32.totalorder %s77, %s80
      %p86 = scmp.eq.s32.totalorder %s18, 0
      %p87 = por %p85, %p86
      %p88 = scmp.ne.s32.totalorder %s77, %s80
      %p89 = scmp.eq.s32.totalorder %s23, 3
      %p90 = por %p88, %p89
      %p91 = scmp.ne.s32.totalorder %s80, %s81
      %p92 = scmp.eq.s32.totalorder %s23, 0
      %p93 = por %p91, %p92
      %p94 = scmp.ne.s32.totalorder %s80, %s81
      %p95 = scmp.eq.s32.totalorder %s24, 3
      %p96 = por %p94, %p95
      %p98 = scmp.ne.s32.totalorder %s81, %s97
      %p99 = scmp.eq.s32.totalorder %s24, 0
      %p100 = por %p98, %p99
      %s101 = ssub.s32 %s26, %s40
      %p102 = scmp.eq.s32.totalorder %s101, 0
      %s104 = sadd.s32 %s103, 1
      %s105 = scalar_select %p102, %s103, %s104
      %p108 = pneg %p102
      %p109 = scmp.eq.s32.totalorder %s18, 3
      %p110 = por %p108, %p109
      %p111 = scmp.ne.s32.totalorder %s103, %s106
      %p112 = scmp.eq.s32.totalorder %s18, 0
      %p113 = por %p111, %p112
      %p114 = scmp.ne.s32.totalorder %s103, %s106
      %p115 = scmp.eq.s32.totalorder %s23, 3
      %p116 = por %p114, %p115
      %p117 = scmp.ne.s32.totalorder %s106, %s107
      %p118 = scmp.eq.s32.totalorder %s23, 0
      %p119 = por %p117, %p118
      %p120 = scmp.ne.s32.totalorder %s106, %s107
      %p121 = scmp.eq.s32.totalorder %s24, 3
      %p122 = por %p120, %p121
      %p124 = scmp.ne.s32.totalorder %s107, %s123
      %p125 = scmp.eq.s32.totalorder %s24, 0
      %p126 = por %p124, %p125
      %s127 = ssub.s32 %s25, %s44
      %s128 = ssub.s32 %s26, %s40
      %s129 = sor.u32 %s127, %s128
      %p130 = scmp.eq.s32.totalorder %s129, 0
      %s132 = sadd.s32 %s131, 1
      %s133 = scalar_select %p130, %s131, %s132
      %p136 = pneg %p130
      %p137 = scmp.eq.s32.totalorder %s18, 3
      %p138 = por %p136, %p137
      %p139 = scmp.ne.s32.totalorder %s131, %s134
      %p140 = scmp.eq.s32.totalorder %s18, 0
      %p141 = por %p139, %p140
      %p142 = scmp.ne.s32.totalorder %s131, %s134
      %p143 = scmp.eq.s32.totalorder %s23, 3
      %p144 = por %p142, %p143
      %p145 = scmp.ne.s32.totalorder %s134, %s135
      %p146 = scmp.eq.s32.totalorder %s23, 0
      %p147 = por %p145, %p146
      %p148 = scmp.ne.s32.totalorder %s134, %s135
      %p149 = scmp.eq.s32.totalorder %s24, 3
      %p150 = por %p148, %p149
      %p152 = scmp.ne.s32.totalorder %s135, %s151
      %p153 = scmp.eq.s32.totalorder %s24, 0
      %p154 = por %p152, %p153
      %p155 = scmp.le.s32.totalorder 1, %s18
      %p156 = scmp.lt.s32.totalorder %s18, 5
      %p157 = pnand %p155, %p156
      %p158 = pneg %p157
      // Predicated region
      $region9: #{tpu_custom_call.1} parent=5 // pred_check
        _
      $region10: #{tpu_custom_call.1} parent=5 // pred_check_branch
        %160 = sbr.rel (%p157) target = $region12
      $region11: #{tpu_custom_call.1} parent=5 // pred_region
        %s161 = ssub.s32 %s18, 1
      $region12: #{tpu_custom_call.1} parent=5 // pred_fallthru
        _
      %p162 = scmp.lt.s32.totalorder %s18, 4
      // Predicated region
      $region13: #{tpu_custom_call.1} parent=5 // pred_check
        %p163 = pneg %p162
      $region14: #{tpu_custom_call.1} parent=5 // pred_check_branch
        %165 = sbr.rel (%p163) target = $region16
      $region15: #{tpu_custom_call.1} parent=5 // pred_region
        // Predicated region
        $region17: #{tpu_custom_call.1} parent=15 // pred_check
          %p166 = pneg %p59
        $region18: #{tpu_custom_call.1} parent=15 // pred_check_branch
          %168 = sbr.rel (%p166) target = $region20
        $region19: #{tpu_custom_call.1} parent=15 // pred_region
          %s169 = sand.u32 %s49, 1
          %s170 = scalar_lea.sflag [#allocation4], %s169
          %s171 = sand.u32 %s49, 1
          %s172 = smul.addr %s171, 8
          %s173 = scalar_lea.vmem [#allocation3], %s172
          %s174 = smul.u32 2, %s25
          %176 = vsyncadd %s170, 0
          %s177 = smul.addr %s174, 2
          %s178 = sadd.s32 %s27, %s177
          %s179 = smul.addr %s178, 4
          %s180 = scalar_lea.hbm %s0, %s179
          %s181 = sshll.u32 %s180, 4
          %s182 = int_to_ptr.hbm [resolvable:$true] %s181
          %s183 = sshll.u32 %s173, 4
          %s184 = int_to_ptr.vmem [resolvable:$true] %s183
          %189 = dma.hbm_to_vmem [thread:$0]  %s182, 128, %s184, %s170, 128, 64, 4
        $region20: #{tpu_custom_call.1} parent=15 // pred_fallthru
          _
        // Predicated region
        $region21: #{tpu_custom_call.1} parent=15 // pred_check
          %p190 = pneg %p87
        $region22: #{tpu_custom_call.1} parent=15 // pred_check_branch
          %192 = sbr.rel (%p190) target = $region24
        $region23: #{tpu_custom_call.1} parent=15 // pred_region
          %s193 = sand.u32 %s18, 1
          %s194 = scalar_lea.sflag [#allocation7], %s193
          %s195 = sand.u32 %s77, 1
          %s196 = smul.addr %s195, 64
          %s197 = scalar_lea.vmem [#allocation6], %s196
          %s198 = smul.u32 16, %s27
          %200 = vsyncadd %s194, 0
          %s201 = smul.addr %s198, 2
          %s202 = sadd.s32 %s26, %s201
          %s203 = smul.addr %s202, 4
          %s204 = scalar_lea.hbm %s1, %s203
          %s205 = sshll.u32 %s204, 4
          %s206 = int_to_ptr.hbm [resolvable:$true] %s205
          %s207 = sshll.u32 %s197, 4
          %s208 = int_to_ptr.vmem [resolvable:$true] %s207
          %213 = dma.hbm_to_vmem [thread:$0]  %s206, 1024, %s208, %s194, 128, 64, 4
        $region24: #{tpu_custom_call.1} parent=15 // pred_fallthru
          _
        // Predicated region
        $region25: #{tpu_custom_call.1} parent=15 // pred_check
          %p214 = pneg %p113
        $region26: #{tpu_custom_call.1} parent=15 // pred_check_branch
          %216 = sbr.rel (%p214) target = $region28
        $region27: #{tpu_custom_call.1} parent=15 // pred_region
          %s217 = sand.u32 %s18, 1
          %s218 = scalar_lea.sflag [#allocation7], %s217
          %s219 = sand.u32 %s103, 1
          %s220 = scalar_lea.vmem [#allocation8], %s219
          %222 = vsyncadd %s218, 0
          %s223 = scalar_lea.hbm %s2, %s26
          %s225 = sshll.u32 %s223, 4
          %s226 = int_to_ptr.hbm [resolvable:$true] %s225
          %s227 = sshll.u32 %s220, 4
          %s228 = int_to_ptr.vmem [resolvable:$true] %s227
          %230 = dma.hbm_to_vmem [thread:$0]  %s226, 16, %s228, %s218
        $region28: #{tpu_custom_call.1} parent=15 // pred_fallthru
          _
      $region16: #{tpu_custom_call.1} parent=5 // pred_fallthru
        _
      %p231 = scmp.le.s32.totalorder 1, %s18
      %p232 = scmp.lt.s32.totalorder %s18, 5
      %p233 = pnand %p231, %p232
      %p234 = pneg %p233
      // Predicated region
      $region29: #{tpu_custom_call.1} parent=5 // pred_check
        _
      $region30: #{tpu_custom_call.1} parent=5 // pred_check_branch
        %236 = sbr.rel (%p233) target = $region32
      $region31: #{tpu_custom_call.1} parent=5 // pred_region
        %s237 = ssub.s32 %s18, 1
        %s238 = sand.u32 %s52, 1
        %s239 = scalar_lea.sflag [#allocation4], %s238
        %s240 = sand.u32 %s52, 1
        %s241 = smul.addr %s240, 8
        %s242 = scalar_lea.vmem [#allocation3], %s241
        // Predicated region
        $region33: #{tpu_custom_call.1} parent=31 // pred_check
          %p243 = pneg %p65
        $region34: #{tpu_custom_call.1} parent=31 // pred_check_branch
          %245 = sbr.rel (%p243) target = $region36
        $region35: #{tpu_custom_call.1} parent=31 // pred_region
          %247 = dma.done %s239, 128
        $region36: #{tpu_custom_call.1} parent=31 // pred_fallthru
          _
        %s248 = sand.u32 %s23, 1
        %s249 = scalar_lea.sflag [#allocation7], %s248
        %s250 = sand.u32 %s80, 1
        %s251 = smul.addr %s250, 64
        %s252 = scalar_lea.vmem [#allocation6], %s251
        // Predicated region
        $region37: #{tpu_custom_call.1} parent=31 // pred_check
          %p253 = pneg %p93
        $region38: #{tpu_custom_call.1} parent=31 // pred_check_branch
          %255 = sbr.rel (%p253) target = $region40
        $region39: #{tpu_custom_call.1} parent=31 // pred_region
          %257 = dma.done %s249, 1024
        $region40: #{tpu_custom_call.1} parent=31 // pred_fallthru
          _
        %s258 = sand.u32 %s23, 1
        %s259 = scalar_lea.sflag [#allocation7], %s258
        %s260 = sand.u32 %s106, 1
        %s261 = scalar_lea.vmem [#allocation8], %s260
        // Predicated region
        $region41: #{tpu_custom_call.1} parent=31 // pred_check
          %p262 = pneg %p119
        $region42: #{tpu_custom_call.1} parent=31 // pred_check_branch
          %264 = sbr.rel (%p262) target = $region44
        $region43: #{tpu_custom_call.1} parent=31 // pred_region
          %266 = dma.done %s259, 16
        $region44: #{tpu_custom_call.1} parent=31 // pred_fallthru
          _
        %s267 = sand.u32 %s52, 1
        %s268 = scalar_lea.sflag [#allocation4], %s267
        %s269 = sand.u32 %s52, 1
        %s270 = smul.addr %s269, 8
        %s271 = scalar_lea.vmem [#allocation3], %s270
        %p272 = pneg %p65
        %p273 = pneg %p62
        %s274 = sand.u32 %s23, 1
        %s275 = scalar_lea.sflag [#allocation7], %s274
        %s276 = sand.u32 %s80, 1
        %s277 = smul.addr %s276, 64
        %s278 = scalar_lea.vmem [#allocation6], %s277
        %p279 = pneg %p93
        %p280 = pneg %p90
        %s281 = sand.u32 %s23, 1
        %s282 = scalar_lea.sflag [#allocation7], %s281
        %s283 = sand.u32 %s106, 1
        %s284 = scalar_lea.vmem [#allocation8], %s283
        %p285 = pneg %p119
        %p286 = pneg %p116
        %p287 = pneg %p147
        %p288 = pneg %p144
        %s289 = sand.u32 %s134, 1
        %s290 = scalar_lea.sflag [#allocation5], %s289
        %s291 = sand.u32 %s134, 1
        %s292 = smul.addr %s291, 16
        %s293 = scalar_lea.vmem [#allocation9], %s292
        %s294 = smul.u32 2, %s28
        %s295 = smul.u32 16, %s30
        %s296 = smul.u32 2, %s28
        %p297 = scmp.eq.s32.totalorder %s30, 0
        // Predicated region
        $region45: #{tpu_custom_call.1} parent=31 // pred_check
          %p298 = pneg %p297
        $region46: #{tpu_custom_call.1} parent=31 // pred_check_branch
          %300 = sbr.rel (%p298) target = $region48
        $region47: #{tpu_custom_call.1} parent=31 // pred_region
          %301 = vst [vmem:[#allocation2] sm:$0xff] 0.0
          %302 = vst [vmem:[#allocation2 + $0x8] sm:$0xff] 0.0
        $region48: #{tpu_custom_call.1} parent=31 // pred_fallthru
          _
        %v303 = vld [vmem:[#allocation2] sm:$0xff]
        %v304 = vld [vmem:[#allocation2 + $0x8] sm:$0xff]
        %v305 = vld [vmem:[%s242] sm:$0xf]
        %v306 = vld [vmem:[%s242 + $0x4] sm:$0xf]
        %v307 = vld [vmem:[%s252] sm:$0xf]
        %v308 = vld [vmem:[%s252 + $0x4] sm:$0xf]
        %v309 = vld [vmem:[%s252 + $0x8] sm:$0xf]
        %v310 = vld [vmem:[%s252 + $0xc] sm:$0xf]
        %v311 = vld [vmem:[%s252 + $0x10] sm:$0xf]
        %v312 = vld [vmem:[%s252 + $0x14] sm:$0xf]
        %v313 = vld [vmem:[%s252 + $0x18] sm:$0xf]
        %v314 = vld [vmem:[%s252 + $0x1c] sm:$0xf]
        %v315 = vld [vmem:[%s252 + $0x20] sm:$0xf]
        %v316 = vld [vmem:[%s252 + $0x24] sm:$0xf]
        %v317 = vld [vmem:[%s252 + $0x28] sm:$0xf]
        %v318 = vld [vmem:[%s252 + $0x2c] sm:$0xf]
        %v319 = vld [vmem:[%s252 + $0x30] sm:$0xf]
        %v320 = vld [vmem:[%s252 + $0x34] sm:$0xf]
        %v321 = vld [vmem:[%s252 + $0x38] sm:$0xf]
        %v322 = vld [vmem:[%s252 + $0x3c] sm:$0xf]
        %v325 = vunpack.c.l.b16 %v305
        %v326 = vunpack.c.l.b16 %v306
        %v327 = vpack.c.b16 %v326, %v325
        %v345 = vunpack.c.l.b16 %v307
        %v346 = vunpack.c.l.b16 %v308
        %v347 = vunpack.c.l.b16 %v309
        %v348 = vunpack.c.l.b16 %v310
        %v349 = vunpack.c.l.b16 %v311
        %v350 = vunpack.c.l.b16 %v312
        %v351 = vunpack.c.l.b16 %v313
        %v352 = vunpack.c.l.b16 %v314
        %v353 = vunpack.c.l.b16 %v315
        %v354 = vunpack.c.l.b16 %v316
        %v355 = vunpack.c.l.b16 %v317
        %v356 = vunpack.c.l.b16 %v318
        %v357 = vunpack.c.l.b16 %v319
        %v358 = vunpack.c.l.b16 %v320
        %v359 = vunpack.c.l.b16 %v321
        %v360 = vunpack.c.l.b16 %v322
        %v361 = vpack.c.b16 %v346, %v345
        %v362 = vpack.c.b16 %v348, %v347
        %v363 = vpack.c.b16 %v350, %v349
        %v364 = vpack.c.b16 %v352, %v351
        %v365 = vpack.c.b16 %v354, %v353
        %v366 = vpack.c.b16 %v356, %v355
        %v367 = vpack.c.b16 %v358, %v357
        %v368 = vpack.c.b16 %v360, %v359
        %377 = vmatpush.bf16.msra.mxu0 %v368
        %378 = vmatpush.bf16.msra.mxu0 %v367
        %379 = vmatpush.bf16.msra.mxu0 %v366
        %380 = vmatpush.bf16.msra.mxu0 %v365
        %381 = vmatpush.bf16.msra.mxu0 %v364
        %382 = vmatpush.bf16.msra.mxu0 %v363
        %383 = vmatpush.bf16.msra.mxu0 %v362
        %384 = vmatpush.bf16.msra.mxu0 %v361
        %385 = vmatmul.bf16.gmra.mxu0 %v327
        %v386 = vpop.f32.mrf.mxu0
        %v387 = vadd.f32 0.0, %v386
        %v388 = vpop.f32.mrf.mxu0
        %v389 = vadd.f32 0.0, %v388
        %390 = vdwg.mxu0
        %v391 = vadd.f32 %v303, %v387
        %v392 = vadd.f32 %v304, %v389
        %393 = vst [vmem:[#allocation2] sm:$0xff] %v391
        %394 = vst [vmem:[#allocation2 + $0x8] sm:$0xff] %v392
        %p395 = scmp.eq.s32.totalorder %s30, 1
        // Predicated region
        $region49: #{tpu_custom_call.1} parent=31 // pred_check
          %p396 = pneg %p395
        $region50: #{tpu_custom_call.1} parent=31 // pred_check_branch
          %398 = sbr.rel (%p396) target = $region52
        $region51: #{tpu_custom_call.1} parent=31 // pred_region
          %v399 = vld [vmem:[#allocation2] sm:$0xff]
          %v400 = vld [vmem:[#allocation2 + $0x8] sm:$0xff]
          %v401 = vld [vmem:[%s261] sm:$0x1]
          %v403 = vperm.slane %v401, 0
          %v405 = vadd.f32 %v399, %v403
          %v406 = vadd.f32 %v400, %v403
          %407 = vst [vmem:[%s293] sm:$0xff] %v405
          %408 = vst [vmem:[%s293 + $0x8] sm:$0xff] %v406
        $region52: #{tpu_custom_call.1} parent=31 // pred_fallthru
          _
        %s409 = sand.u32 %s134, 1
        %s410 = scalar_lea.sflag [#allocation5], %s409
        %s411 = sand.u32 %s134, 1
        %s412 = smul.addr %s411, 16
        %s413 = scalar_lea.vmem [#allocation9], %s412
        // Predicated region
        $region53: #{tpu_custom_call.1} parent=31 // pred_check
          %p414 = pneg %p144
        $region54: #{tpu_custom_call.1} parent=31 // pred_check_branch
          %416 = sbr.rel (%p414) target = $region56
        $region55: #{tpu_custom_call.1} parent=31 // pred_region
          %s417 = smul.u32 2, %s28
          %419 = vsyncadd %s410, 0
          %s420 = smul.addr %s417, 2
          %s421 = sadd.s32 %s29, %s420
          %s422 = smul.addr %s421, 8
          %s423 = scalar_lea.hbm %s3, %s422
          %s424 = sshll.u32 %s413, 4
          %s425 = int_to_ptr.vmem [resolvable:$true] %s424
          %s426 = sshll.u32 %s423, 4
          %s427 = int_to_ptr.hbm [resolvable:$true] %s426
          %432 = dma.vmem_to_hbm [thread:$0]  %s425, 256, %s427, %s410, 128, 256, 8
        $region56: #{tpu_custom_call.1} parent=31 // pred_fallthru
          _
      $region32: #{tpu_custom_call.1} parent=5 // pred_fallthru
        _
      %p433 = scmp.le.s32.totalorder 2, %s18
      // Predicated region
      $region57: #{tpu_custom_call.1} parent=5 // pred_check
        %p434 = pneg %p433
      $region58: #{tpu_custom_call.1} parent=5 // pred_check_branch
        %436 = sbr.rel (%p434) target = $region60
      $region59: #{tpu_custom_call.1} parent=5 // pred_region
        %s437 = ssub.s32 %s18, 2
        // Predicated region
        $region61: #{tpu_custom_call.1} parent=59 // pred_check
          %p438 = pneg %p150
        $region62: #{tpu_custom_call.1} parent=59 // pred_check_branch
          %440 = sbr.rel (%p438) target = $region64
        $region63: #{tpu_custom_call.1} parent=59 // pred_region
          %s441 = sand.u32 %s135, 1
          %s442 = scalar_lea.sflag [#allocation5], %s441
          %s443 = sand.u32 %s135, 1
          %s444 = smul.addr %s443, 16
          %s445 = scalar_lea.vmem [#allocation9], %s444
          %447 = dma.done %s442, 256
        $region64: #{tpu_custom_call.1} parent=59 // pred_fallthru
          _
      $region60: #{tpu_custom_call.1} parent=5 // pred_fallthru
        _
    $region6: #{tpu_custom_call.1} parent=1 // loop_footer
      %s22 = sadd.s32 1, %s18
    $region7: #{tpu_custom_call.1} parent=1 // loop_footer_branch
      %17 = sbr.rel target = $region3
    $region8: #{tpu_custom_call.1} parent=1 // loop_exit
      _
    %448 = vsyncpa [#allocation4], 1
    %s449 = scalar_lea.sflag [#allocation4], 1
    %450 = vsyncpa %s449, 1
    %451 = vsyncpa [#allocation7], 1
    %s452 = scalar_lea.sflag [#allocation7], 1
    %453 = vsyncpa %s452, 1
    %454 = vsyncpa [#allocation5], 1
    %s455 = scalar_lea.sflag [#allocation5], 1
    %456 = vsyncpa %s455, 1

</llo_original>
